<compile_context>
chip_gen: v7x
topology: tpu7x:2x2x1
jax: 0.10.0
libtpu: 0.0.40
codegen_flags: <defaults>
</compile_context>

<pallas_src>
import functools

import jax
import jax.numpy as jnp
from jax.experimental import pallas as pl
from jax.experimental.pallas import tpu as pltpu

LANE = 128
SUBLANE = 8
NEG_BIG = -9e15          # same mask constant as the PyTorch reference


def _round_up(x, m):
    return ((x + m - 1) // m) * m


def _device_config():
    """Per-generation knobs: elementwise compute dtype, VMEM limit, row-tile cap."""
    kind = ""
    try:
        kind = jax.devices()[0].device_kind.lower()
    except Exception:
        pass
    # bf16 VPU/EUP exist on v6e and newer; keep f32 elementwise math elsewhere (v5e).
    bf16_vpu = ("v6" in kind) or ("v7" in kind)
    compute_dtype = jnp.bfloat16 if bf16_vpu else jnp.float32
    # v5e/v6e have 128 MiB physical VMEM -> raise the scoped limit and allow bigger
    # row tiles; v7x (64 MiB) and unknown chips keep the conservative settings.
    big_vmem = ("v5" in kind) or ("v6" in kind)
    vmem_limit = (96 if big_vmem else 48) * 1024 * 1024
    tile_cap = 256 if big_vmem else 128
    return compute_dtype, vmem_limit, tile_cap


# ----------------------------------------------------------------------------
# Kernel A: projection + attention-score vectors, row-tiled over the graph
# ----------------------------------------------------------------------------
def _project_kernel(h_ref, w_ref, acat_ref, wh_ref, scores_ref):
    # bf16 MXU inputs, f32 accumulation (the only large-K matmul in the layer).
    wh = jnp.dot(h_ref[...], w_ref[...], preferred_element_type=jnp.float32)
    wh_ref[...] = wh.astype(jnp.bfloat16)
    # Per-head src/dst attention scores in one fused matmul against
    # [a_src | a_dst] (P, 2H): no contraction over Wh's last dim -> no Wh^T.
    scores_ref[...] = jnp.dot(wh, acat_ref[...],
                              preferred_element_type=jnp.float32)


# ----------------------------------------------------------------------------
# Kernel B: masked softmax attention + aggregation, row-tiled over the graph
# ----------------------------------------------------------------------------
def _attend_kernel(adj_ref, src_ref, dstt_ref, wh_ref, out_ref, *,
                   nheads, f_out, total_f, alpha,
                   apply_elu, apply_log_softmax, compute_dtype):
    cdt = compute_dtype
    # Additive mask computed ONCE per row block and shared by all heads:
    # 0 on edges, -9e15 off edges.  Built via the (proven) i8->i32 compare and
    # f32 select, then cast once to the compute dtype.
    mask = adj_ref[...].astype(jnp.int32) > 0
    neg_bias = jnp.where(mask, 0.0, NEG_BIG).astype(cdt)         # (TM, N)

    src = src_ref[...]                                           # (TM, H) f32
    dstt = dstt_ref[...]                                         # (H, N)  f32

    outs = []
    for hd in range(nheads):
        e = (src[:, hd:hd + 1].astype(cdt)
             + dstt[hd:hd + 1, :].astype(cdt))                   # (TM, N) cdt
        # LeakyReLU(alpha in (0,1)) == max(e, alpha*e); fused with the adjacency
        # mask as an additive bias.  (Mask applied after LeakyReLU: identical to
        # the reference whenever a row has >= 1 edge, guaranteed by self-loops.)
        e = jnp.maximum(e, e * alpha) + neg_bias
        m = jnp.max(e, axis=1, keepdims=True)
        p = jnp.exp(e - m)                                       # unnormalized softmax
        denom = jnp.sum(p.astype(jnp.float32), axis=1, keepdims=True)   # f32 row sum
        # TODO(synk): attention/feature dropout omitted (module in eval mode -> identity).
        wh_h = wh_ref[:, hd * f_out:(hd + 1) * f_out]            # (N, f_out) bf16
        # bf16 MXU inputs with f32 accumulation; normalization deferred past the
        # matmul so the O(N^2) divide becomes an O(N*f_out) multiply + reciprocal.
        hp = jnp.dot(p.astype(jnp.bfloat16), wh_h,
                     preferred_element_type=jnp.float32)         # (TM, f_out) f32
        # Exact reciprocal in the final (log_softmax) layer, approx (EUP) elsewhere.
        hp = hp * pl.reciprocal(denom, approx=not apply_log_softmax)
        outs.append(hp)

    res = outs[0] if nheads == 1 else jnp.concatenate(outs, axis=-1)   # (TM, total_f)

    if apply_elu:
        # NOTE: exp(x)-1 instead of expm1: <= 1 ulp(1) absolute deviation.
        res = jnp.where(res > 0, res, jnp.exp(res) - 1.0)

    if apply_log_softmax:
        mm = jnp.max(res, axis=-1, keepdims=True)
        lse = jnp.log(jnp.sum(jnp.exp(res - mm), axis=-1, keepdims=True)) + mm
        res = res - lse

    # Zero-pad to the lane-dense (multiple of 128) output width: one unmasked store.
    pad = out_ref.shape[-1] - total_f
    if pad:
        res = jnp.concatenate(
            [res, jnp.zeros((res.shape[0], pad), jnp.float32)], axis=-1)
    out_ref[...] = res.astype(out_ref.dtype)


# ----------------------------------------------------------------------------
# Layer wrapper: row-tiled projection call + row-tiled attention call (all heads)
# ----------------------------------------------------------------------------
def gat_layer(h_pad, adj_i8, w_all, a_cat, *, nheads, f_out, alpha,
              apply_elu, apply_log_softmax, tile_m, out_dtype,
              compute_dtype, vmem_limit):
    n_pad, f_in = h_pad.shape
    p_w = w_all.shape[1]                  # padded projected/output width (mult of 128)
    total_f = nheads * f_out
    assert n_pad % tile_m == 0
    grid = (n_pad // tile_m,)
    cparams = pltpu.CompilerParams(
        dimension_semantics=("parallel",),       # independent row blocks -> megacore
        vmem_limit_bytes=vmem_limit)

    # Kernel A: projection + score vectors (pipelined, parallel row grid).
    wh, scores = pl.pallas_call(
        _project_kernel,
        out_shape=(jax.ShapeDtypeStruct((n_pad, p_w), jnp.bfloat16),
                   jax.ShapeDtypeStruct((n_pad, 2 * nheads), jnp.float32)),
        grid=grid,
        in_specs=[
            pl.BlockSpec((tile_m, f_in), lambda i: (i, 0)),      # h rows (bf16)
            pl.BlockSpec((f_in, p_w), lambda i: (0, 0)),         # W_all  (resident)
            pl.BlockSpec((p_w, 2 * nheads), lambda i: (0, 0)),   # [a_src | a_dst]
        ],
        out_specs=(pl.BlockSpec((tile_m, p_w), lambda i: (i, 0)),
                   pl.BlockSpec((tile_m, 2 * nheads), lambda i: (i, 0))),
        compiler_params=cparams,
    )(h_pad, w_all, a_cat)

    # Only the tiny (N, H) score block is sliced/transposed (outside Pallas);
    # ~P/H less cross-lane work than transposing Wh inside the projection.
    src = scores[:, :nheads]                       # (N, H)
    dstt = jnp.transpose(scores[:, nheads:])       # (H, N), already row-major per head

    kernel = functools.partial(
        _attend_kernel, nheads=nheads, f_out=f_out, total_f=total_f,
        alpha=float(alpha), apply_elu=apply_elu,
        apply_log_softmax=apply_log_softmax, compute_dtype=compute_dtype)

    # TODO(synk): for very large N on v7x (64 MiB VMEM), add a second
    # ('arbitrary') column-block grid axis with online softmax and single-buffer
    # the grid-invariant wh/dstt blocks (pl.Buffered(1)) to stay in VMEM.
    out = pl.pallas_call(
        kernel,
        out_shape=jax.ShapeDtypeStruct((n_pad, p_w), out_dtype),
        grid=grid,
        in_specs=[
            pl.BlockSpec((tile_m, n_pad), lambda i: (i, 0)),     # adj rows (int8)
            pl.BlockSpec((tile_m, nheads), lambda i: (i, 0)),    # src score rows
            pl.BlockSpec((nheads, n_pad), lambda i: (0, 0)),     # dstT (VMEM resident)
            pl.BlockSpec((n_pad, p_w), lambda i: (0, 0)),        # Wh bf16 (resident)
        ],
        out_specs=pl.BlockSpec((tile_m, p_w), lambda i: (i, 0)),
        compiler_params=cparams,
    )(adj_i8, src, dstt, wh)
    return out


def _pack_heads(head_params, f_in, f_out):
    """Stack per-head (W, a) into fused, zero-padded weight blocks.

    Returns W_all (f_in, P) in bf16 and A_cat (P, 2H) in f32, where column h is
    head h's source vector and column H+h its destination vector,
    P = round_up(H*f_out, 128) so projection and layer output are lane-dense.
    """
    nheads = len(head_params)
    p_w = _round_up(nheads * f_out, LANE)
    w_all = jnp.zeros((f_in, p_w), jnp.float32)
    a_cat = jnp.zeros((p_w, 2 * nheads), jnp.float32)
    for hd, (w, a) in enumerate(head_params):
        c0 = hd * f_out
        w_all = w_all.at[:w.shape[0], c0:c0 + f_out].set(w.astype(jnp.float32))
        a_cat = a_cat.at[c0:c0 + f_out, hd].set(a[:f_out, 0].astype(jnp.float32))
        a_cat = a_cat.at[c0:c0 + f_out, nheads + hd].set(
            a[f_out:, 0].astype(jnp.float32))
    return w_all.astype(jnp.bfloat16), a_cat


def init_gat_params(key, nfeat, nhid, nclass, nheads):
    """Deterministic xavier-uniform-ish init matching the PyTorch parameter shapes."""
    params = {"attentions": [], "out": None}

    def xavier(k, shape):
        fan_in, fan_out = shape[0], shape[1]
        limit = (6.0 / (fan_in + fan_out)) ** 0.5
        return jax.random.uniform(k, shape, jnp.float32, -limit, limit)

    keys = jax.random.split(key, 2 * nheads + 2)
    for h in range(nheads):
        w = xavier(keys[2 * h], (nfeat, nhid))
        a = xavier(keys[2 * h + 1], (2 * nhid, 1))
        params["attentions"].append((w, a))
    w_out = xavier(keys[-2], (nhid * nheads, nclass))
    a_out = xavier(keys[-1], (2 * nclass, 1))
    params["out"] = (w_out, a_out)
    return params


def gat_forward(x, adj, params, *, alpha):
    n, nfeat = x.shape
    nheads = len(params["attentions"])
    nhid = params["attentions"][0][0].shape[1]
    nclass = params["out"][0].shape[1]

    compute_dtype, vmem_limit, tile_cap = _device_config()

    # Row tiling: small graphs -> one block; large graphs -> tile_cap-row blocks.
    tile_m = _round_up(n, SUBLANE) if n <= tile_cap else tile_cap
    n_pad = _round_up(n, tile_m)

    # adj as int8, built once and reused by every layer (4x less HBM than f32).
    adj_i8 = jnp.zeros((n_pad, n_pad), jnp.int8).at[:n, :n].set(
        (adj > 0).astype(jnp.int8))
    # Input features carried in bf16 (MXU inputs are bf16 anyway).
    x_pad = jnp.zeros((n_pad, nfeat), jnp.bfloat16).at[:n, :].set(
        x.astype(jnp.bfloat16))

    # TODO(synk): F.dropout on features / attention runs in eval mode -> identity.

    # Layer 1: all attention heads fused; concatenated, ELU'd head outputs kept
    # in bf16 so layer 2's projection consumes them without a cast.
    w1, acat1 = _pack_heads(params["attentions"], nfeat, nhid)
    h1 = gat_layer(x_pad, adj_i8, w1, acat1,
                   nheads=nheads, f_out=nhid, alpha=alpha,
                   apply_elu=True, apply_log_softmax=False,
                   tile_m=tile_m, out_dtype=jnp.bfloat16,
                   compute_dtype=compute_dtype, vmem_limit=vmem_limit)

    # Layer 2: out_att (concat=False) + elu + log_softmax, all fused in-kernel.
    w2, acat2 = _pack_heads([params["out"]], h1.shape[1], nclass)
    out = gat_layer(h1, adj_i8, w2, acat2,
                    nheads=1, f_out=nclass, alpha=alpha,
                    apply_elu=True, apply_log_softmax=True,
                    tile_m=tile_m, out_dtype=jnp.float32,
                    compute_dtype=compute_dtype, vmem_limit=vmem_limit)

    return out[:n, :nclass]


def _gat_reference(x, adj, params, alpha):
    """Pure-JAX f32 reference mirroring the PyTorch module (eval mode)."""
    def layer(h, w, a, concat):
        wh = h @ w
        f = w.shape[1]
        e = wh @ a[:f] + (wh @ a[f:]).T
        e = jnp.where(e > 0, e, alpha * e)                       # LeakyReLU
        att = jax.nn.softmax(jnp.where(adj > 0, e, NEG_BIG), axis=1)
        hp = att @ wh
        return jax.nn.elu(hp) if concat else hp

    h = jnp.concatenate(
        [layer(x, w, a, True) for (w, a) in params["attentions"]], axis=1)
    w_o, a_o = params["out"]
    return jax.nn.log_softmax(jax.nn.elu(layer(h, w_o, a_o, False)), axis=1)


if __name__ == "__main__":
    # Small, deterministic example consistent with the module's forward:
    # N nodes, nfeat input features, nhid hidden per head, nheads heads, nclass classes.
    N, nfeat, nhid, nclass, nheads = 16, 16, 8, 4, 2
    alpha = 0.2

    key = jax.random.PRNGKey(0)
    k_x, k_adj, k_p = jax.random.split(key, 3)

    x = jax.random.normal(k_x, (N, nfeat), jnp.float32)
    # Random sparse-ish adjacency with self-loops (values > 0 mark edges).
    adj = (jax.random.uniform(k_adj, (N, N)) > 0.6).astype(jnp.float32)
    adj = jnp.maximum(adj, jnp.eye(N, dtype=jnp.float32))

    params = init_gat_params(k_p, nfeat, nhid, nclass, nheads)

    out = gat_forward(x, adj, params, alpha=alpha)
    out = jax.block_until_ready(out)

    assert out.shape == (N, nclass), out.shape
    assert bool(jnp.all(jnp.isfinite(out)))
    # rows of log_softmax must exp-sum to 1
    assert jnp.allclose(jnp.sum(jnp.exp(out), axis=1), 1.0, atol=1e-4)
    # agree with the f32 reference up to bf16 activation/attention precision
    ref = _gat_reference(x, adj, params, alpha)
    assert jnp.allclose(out, ref, atol=0.2), float(jnp.max(jnp.abs(out - ref)))
    print("KERNEL_OK")
</pallas_src>

<mosaic_0001>
module attributes {stable_mosaic.version = 11 : i64} {
  func.func @_project_kernel(%arg0: i32, %arg1: memref<16x16xbf16, #tpu.memory_space<vmem>>, %arg2: memref<16x128xbf16, #tpu.memory_space<vmem>>, %arg3: memref<128x4xf32, #tpu.memory_space<vmem>>, %arg4: memref<16x128xbf16, #tpu.memory_space<vmem>>, %arg5: memref<16x4xf32, #tpu.memory_space<vmem>>) attributes {dimension_semantics = [#tpu.dimension_semantics<parallel>], iteration_bounds = array<i64: 1>, scalar_prefetch = 0 : i64, scratch_operands = 0 : i64, tpu.core_type = #tpu.core_type<tc>, window_params = [{transform_indices = @transform_0, window_bounds = array<i64: 16, 16>}, {pipeline_mode = #tpu.pipeline_mode<synchronous>, transform_indices = @transform_1, window_bounds = array<i64: 16, 128>}, {pipeline_mode = #tpu.pipeline_mode<synchronous>, transform_indices = @transform_2, window_bounds = array<i64: 128, 4>}, {transform_indices = @transform_3, window_bounds = array<i64: 16, 128>}, {transform_indices = @transform_4, window_bounds = array<i64: 16, 4>}]} {
    %c0 = arith.constant 0 : index
    %c0_0 = arith.constant 0 : index
    %0 = vector.load %arg1[%c0, %c0_0] : memref<16x16xbf16, #tpu.memory_space<vmem>>, vector<16x16xbf16>
    %c0_1 = arith.constant 0 : index
    %c0_2 = arith.constant 0 : index
    %1 = vector.load %arg2[%c0_1, %c0_2] : memref<16x128xbf16, #tpu.memory_space<vmem>>, vector<16x128xbf16>
    %cst = arith.constant dense<0.000000e+00> : vector<16x128xf32>
    %2 = tpu.matmul %0, %1, %cst {dimension_numbers = #tpu.dot_dimension_numbers<[1], [0], [0], [1], [0, 0, 1, 1], [], []>} : vector<16x16xbf16>, vector<16x128xbf16>, vector<16x128xf32> -> vector<16x128xf32>
    %3 = arith.truncf %2 : vector<16x128xf32> to vector<16x128xbf16>
    %c0_3 = arith.constant 0 : index
    %c0_4 = arith.constant 0 : index
    %4 = vector.load %arg4[%c0_3, %c0_4] : memref<16x128xbf16, #tpu.memory_space<vmem>>, vector<16x128xbf16>
    tpu.vector_store %arg4[%c0_3, %c0_4], %3 {strides = array<i32>} : memref<16x128xbf16, #tpu.memory_space<vmem>>, vector<16x128xbf16>,
    %c0_5 = arith.constant 0 : index
    %c0_6 = arith.constant 0 : index
    %5 = vector.load %arg3[%c0_5, %c0_6] : memref<128x4xf32, #tpu.memory_space<vmem>>, vector<128x4xf32>
    %cst_7 = arith.constant dense<0.000000e+00> : vector<16x4xf32>
    %6 = tpu.matmul %2, %5, %cst_7 {dimension_numbers = #tpu.dot_dimension_numbers<[1], [0], [0], [1], [0, 0, 1, 1], [], []>} : vector<16x128xf32>, vector<128x4xf32>, vector<16x4xf32> -> vector<16x4xf32>
    %c0_8 = arith.constant 0 : index
    %c0_9 = arith.constant 0 : index
    %7 = vector.load %arg5[%c0_8, %c0_9] : memref<16x4xf32, #tpu.memory_space<vmem>>, vector<16x4xf32>
    tpu.vector_store %arg5[%c0_8, %c0_9], %6 {strides = array<i32>} : memref<16x4xf32, #tpu.memory_space<vmem>>, vector<16x4xf32>,
    return
  }
  func.func @transform_0(%arg0: i32) -> (i32, i32) {
    %c0_i32 = arith.constant 0 : i32
    %c0_i32_0 = arith.constant 0 : i32
    return %arg0, %c0_i32 : i32, i32
  }
  func.func @transform_1(%arg0: i32) -> (i32, i32) {
    %c0_i32 = arith.constant 0 : i32
    %c0_i32_0 = arith.constant 0 : i32
    %c0_i32_1 = arith.constant 0 : i32
    return %c0_i32, %c0_i32_0 : i32, i32
  }
  func.func @transform_2(%arg0: i32) -> (i32, i32) {
    %c0_i32 = arith.constant 0 : i32
    %c0_i32_0 = arith.constant 0 : i32
    %c0_i32_1 = arith.constant 0 : i32
    return %c0_i32, %c0_i32_0 : i32, i32
  }
  func.func @transform_3(%arg0: i32) -> (i32, i32) {
    %c0_i32 = arith.constant 0 : i32
    %c0_i32_0 = arith.constant 0 : i32
    return %arg0, %c0_i32 : i32, i32
  }
  func.func @transform_4(%arg0: i32) -> (i32, i32) {
    %c0_i32 = arith.constant 0 : i32
    %c0_i32_0 = arith.constant 0 : i32
    return %arg0, %c0_i32 : i32, i32
  }
}

</mosaic_0001>

<llo_original>
// kernel: tpu_custom_call.1
$region0: #{tpu_custom_call.1}
  #allocation0 [shape = 'u32[]', space=smem, size = 0x4, offset = 0x4, fixed_abs, tag = 'smem constant byte address 0x4 - core index']
  #allocation1 [shape = 'u32[144,128]{1,0:T(1,128)}', space=vmem, size = 0x12000, scoped, tag = 'internal scratch']
  %s0 = inlined_call_operand.vmem [shape: bf16[16,16], index: 0, kind: input, shape index: {}]
  %s1 = inlined_call_operand.vmem [shape: bf16[16,128], index: 1, kind: input, shape index: {}]
  %s2 = inlined_call_operand.vmem [shape: f32[128,4], index: 2, kind: input, shape index: {}]
  %s3 = inlined_call_operand.hbm [shape: bf16[16,128], index: 3, kind: output, shape index: {0}]
  %s4 = inlined_call_operand.vmem [shape: f32[16,4], index: 4, kind: output, shape index: {1}]
  %5 = xla_tuple %s3, %s4
  %s6 = sld [smem:[#allocation0]]
  $region30: #{tpu_custom_call.1} parent=0
    _
  %s8 = ssub.s32 1, %s6
  %s9 = scalar_select 0, %s8, %s6
  $region1: #{tpu_custom_call.1} parent=0
    #allocation2 [shape = 'u8[4096]{0}', space=vmem, size = 0x1000, scoped, tag = 'output window, operand 0, single buffered']
    #allocation3 [shape = 's32[1]{0}', space=sflag, size = 0x4, scoped, tag = 'scoped memory for tpu_custom_call.1']
    %10 = vsyncpa [#allocation3], 0
    // Predicated region
    $region2: #{tpu_custom_call.1} parent=1 // pred_check
      _
    $region3: #{tpu_custom_call.1} parent=1 // pred_check_branch
      %12 = sbr.rel (0) target = $region5
    $region4: #{tpu_custom_call.1} parent=1 // pred_region
      _
    $region5: #{tpu_custom_call.1} parent=1 // pred_fallthru
      _
    // Predicated region
    $region6: #{tpu_custom_call.1} parent=1 // pred_check
      _
    $region7: #{tpu_custom_call.1} parent=1 // pred_check_branch
      %14 = sbr.rel (0) target = $region9
    $region8: #{tpu_custom_call.1} parent=1 // pred_region
      _
    $region9: #{tpu_custom_call.1} parent=1 // pred_fallthru
      _
    // Predicated region
    $region10: #{tpu_custom_call.1} parent=1 // pred_check
      _
    $region11: #{tpu_custom_call.1} parent=1 // pred_check_branch
      %16 = sbr.rel (0) target = $region13
    $region12: #{tpu_custom_call.1} parent=1 // pred_region
      _
    $region13: #{tpu_custom_call.1} parent=1 // pred_fallthru
      _
    %v18 = vld [vmem:[%s0] sm:$0xf]
    %v19 = vld [vmem:[%s0 + $0x4] sm:$0xf]
    %v20 = vld [vmem:[%s1] sm:$0xf]
    %v21 = vld [vmem:[%s1 + $0x4] sm:$0xf]
    %v24 = vunpack.c.l.b16 %v18
    %v25 = vunpack.c.l.b16 %v19
    %v26 = vpack.c.b16 %v25, %v24
    %v29 = vunpack.c.l.b16 %v20
    %v30 = vunpack.c.l.b16 %v21
    %v31 = vpack.c.b16 %v30, %v29
    %vm33 = vcmask 130048
    %v35 = vsel %vm33, %v26, 0
    %37 = vmatprep.subr.bf16.mxu0 0
    %38 = vmatpush1.bf16.msra.mxu0 %v31
    %39 = vmatprep.subr.bf16.mxu0 0
    %40 = vmatpush1.bf16.msra.mxu0 0
    %41 = vmatprep.subr.bf16.mxu0 0
    %42 = vmatpush1.bf16.msra.mxu0 0
    %43 = vmatprep.subr.bf16.mxu0 0
    %44 = vmatpush1.bf16.msra.mxu0 0
    %45 = vmatprep.subr.bf16.mxu0 0
    %46 = vmatpush1.bf16.msra.mxu0 0
    %47 = vmatprep.subr.bf16.mxu0 0
    %48 = vmatpush1.bf16.msra.mxu0 0
    %49 = vmatprep.subr.bf16.mxu0 0
    %50 = vmatpush1.bf16.msra.mxu0 0
    %51 = vmatprep.subr.bf16.mxu0 0
    %52 = vmatpush1.bf16.msra.mxu0 0
    %53 = vmatprep.subr.bf16.mxu0 0
    %54 = vmatpush1.bf16.msra.mxu0 0
    %55 = vmatprep.subr.bf16.mxu0 0
    %56 = vmatpush1.bf16.msra.mxu0 0
    %57 = vmatprep.subr.bf16.mxu0 0
    %58 = vmatpush1.bf16.msra.mxu0 0
    %59 = vmatprep.subr.bf16.mxu0 0
    %60 = vmatpush1.bf16.msra.mxu0 0
    %61 = vmatprep.subr.bf16.mxu0 0
    %62 = vmatpush1.bf16.msra.mxu0 0
    %63 = vmatprep.subr.bf16.mxu0 0
    %64 = vmatpush1.bf16.msra.mxu0 0
    %65 = vmatprep.subr.bf16.mxu0 0
    %66 = vmatpush1.bf16.msra.mxu0 0
    %67 = vmatprep.subr.bf16.mxu0 0
    %68 = vmatpush1.bf16.msra.mxu0 0
    %69 = vmatprep.mubr.bf16.mxu0 0
    %70 = vmatmul.mubr.bf16.gmra.mrb[0].mxu0 %v35
    %v71 = vpop.f32.mrb[0].mxu0
    %v72 = vadd.f32 0.0, %v71
    %v73 = vpop.f32.mrb[0].mxu0
    %v74 = vpop.f32.mrb[0].mxu0
    %v75 = vadd.f32 0.0, %v74
    %v76 = vpop.f32.mrb[0].mxu0
    %77 = vdwg.mxu0
    %v78 = vpack.c.bf16 %v75, %v72
    %v80 = vunpack.c.l.b16 %v78
    %v81 = vunpack.c.h.b16 %v78
    %v82 = vpack.c.b16 %v80, %v80
    %v83 = vpack.c.b16 %v81, %v81
    %86 = vst [vmem:[#allocation2] sm:$0xf] %v82
    %87 = vst [vmem:[#allocation2 + $0x4] sm:$0xf] %v83
    %v88 = vld [vmem:[%s2] sm:$0xff]
    %v89 = vld [vmem:[%s2 + $0x8] sm:$0xff]
    %v90 = vld [vmem:[%s2 + $0x10] sm:$0xff]
    %v91 = vld [vmem:[%s2 + $0x18] sm:$0xff]
    %v92 = vld [vmem:[%s2 + $0x20] sm:$0xff]
    %v93 = vld [vmem:[%s2 + $0x28] sm:$0xff]
    %v94 = vld [vmem:[%s2 + $0x30] sm:$0xff]
    %v95 = vld [vmem:[%s2 + $0x38] sm:$0xff]
    %v96 = vld [vmem:[%s2 + $0x40] sm:$0xff]
    %v97 = vld [vmem:[%s2 + $0x48] sm:$0xff]
    %v98 = vld [vmem:[%s2 + $0x50] sm:$0xff]
    %v99 = vld [vmem:[%s2 + $0x58] sm:$0xff]
    %v100 = vld [vmem:[%s2 + $0x60] sm:$0xff]
    %v101 = vld [vmem:[%s2 + $0x68] sm:$0xff]
    %v102 = vld [vmem:[%s2 + $0x70] sm:$0xff]
    %v103 = vld [vmem:[%s2 + $0x78] sm:$0xff]
    %104 = vmatprep.subr.mxu0 0.0
    %105 = vmatpush1.msra.mxu0 %v88
    %106 = vmatprep.subr.mxu0 0.0
    %107 = vmatpush1.msra.mxu0 %v89
    %108 = vmatprep.subr.mxu0 0.0
    %109 = vmatpush1.msra.mxu0 %v90
    %110 = vmatprep.subr.mxu0 0.0
    %111 = vmatpush1.msra.mxu0 %v91
    %112 = vmatprep.subr.mxu0 0.0
    %113 = vmatpush1.msra.mxu0 %v92
    %114 = vmatprep.subr.mxu0 0.0
    %115 = vmatpush1.msra.mxu0 %v93
    %116 = vmatprep.subr.mxu0 0.0
    %117 = vmatpush1.msra.mxu0 %v94
    %118 = vmatprep.subr.mxu0 0.0
    %119 = vmatpush1.msra.mxu0 %v95
    %120 = vmatprep.subr.mxu0 0.0
    %121 = vmatpush1.msra.mxu0 %v96
    %122 = vmatprep.subr.mxu0 0.0
    %123 = vmatpush1.msra.mxu0 %v97
    %124 = vmatprep.subr.mxu0 0.0
    %125 = vmatpush1.msra.mxu0 %v98
    %126 = vmatprep.subr.mxu0 0.0
    %127 = vmatpush1.msra.mxu0 %v99
    %128 = vmatprep.subr.mxu0 0.0
    %129 = vmatpush1.msra.mxu0 %v100
    %130 = vmatprep.subr.mxu0 0.0
    %131 = vmatpush1.msra.mxu0 %v101
    %132 = vmatprep.subr.mxu0 0.0
    %133 = vmatpush1.msra.mxu0 %v102
    %134 = vmatprep.subr.mxu0 0.0
    %135 = vmatpush1.msra.mxu0 %v103
    %136 = vmatprep.subr.mxu0 0.0
    %137 = vmatpush1.msra.mxu0 0.0
    %138 = vmatprep.subr.mxu0 0.0
    %139 = vmatpush1.msra.mxu0 0.0
    %140 = vmatprep.subr.mxu0 0.0
    %141 = vmatpush1.msra.mxu0 0.0
    %142 = vmatprep.subr.mxu0 0.0
    %143 = vmatpush1.msra.mxu0 0.0
    %144 = vmatprep.subr.mxu0 0.0
    %145 = vmatpush1.msra.mxu0 0.0
    %146 = vmatprep.subr.mxu0 0.0
    %147 = vmatpush1.msra.mxu0 0.0
    %148 = vmatprep.subr.mxu0 0.0
    %149 = vmatpush1.msra.mxu0 0.0
    %150 = vmatprep.subr.mxu0 0.0
    %151 = vmatpush1.msra.mxu0 0.0
    %152 = vmatprep.subr.mxu0 0.0
    %153 = vmatpush1.msra.mxu0 0.0
    %154 = vmatprep.subr.mxu0 0.0
    %155 = vmatpush1.msra.mxu0 0.0
    %156 = vmatprep.subr.mxu0 0.0
    %157 = vmatpush1.msra.mxu0 0.0
    %158 = vmatprep.subr.mxu0 0.0
    %159 = vmatpush1.msra.mxu0 0.0
    %160 = vmatprep.subr.mxu0 0.0
    %161 = vmatpush1.msra.mxu0 0.0
    %162 = vmatprep.subr.mxu0 0.0
    %163 = vmatpush1.msra.mxu0 0.0
    %164 = vmatprep.subr.mxu0 0.0
    %165 = vmatpush1.msra.mxu0 0.0
    %166 = vmatprep.subr.mxu0 0.0
    %167 = vmatpush1.msra.mxu0 0.0
    %168 = vmatprep.mubr.f32.mxu0 0.0
    %169 = vmatmul.mubr.f32.gmra.mrb[0].mxu0 %v72
    %v170 = vpop.f32.mrb[0].mxu0
    %v171 = vadd.f32 0.0, %v170
    %v172 = vpop.f32.mrb[0].mxu0
    %173 = vmatprep.mubr.f32.mxu0 0.0
    %174 = vmatmul.mubr.f32.gmra.mrb[0].mxu0 %v75
    %v175 = vpop.f32.mrb[0].mxu0
    %v176 = vadd.f32 0.0, %v175
    %v177 = vpop.f32.mrb[0].mxu0
    %178 = vdwg.mxu0
    %vm179 = vcmask 31744
    %180 = vst.msk [vmem:[%s4] sm:$0xff] %vm179, %v171
    %181 = vst.msk [vmem:[%s4 + $0x8] sm:$0xff] %vm179, %v176
    // Predicated region
    $region14: #{tpu_custom_call.1} parent=1 // pred_check
      _
    $region15: #{tpu_custom_call.1} parent=1 // pred_check_branch
      %183 = sbr.rel (0) target = $region17
    $region16: #{tpu_custom_call.1} parent=1 // pred_region
      %s185 = ssub.s32 128, 128
      %186 = vsyncadd [#allocation3], %s185
      %s187 = sshll.u32 [#allocation2], 4
      %s188 = int_to_ptr.vmem [resolvable:$true] %s187
      %193 = dma.vmem_to_hbm [thread:$0]  %s188, 128, %s3, [#allocation3], 64, 64, 4
    $region17: #{tpu_custom_call.1} parent=1 // pred_fallthru
      _
    // Predicated region
    $region18: #{tpu_custom_call.1} parent=1 // pred_check
      _
    $region19: #{tpu_custom_call.1} parent=1 // pred_check_branch
      %195 = sbr.rel (0) target = $region21
    $region20: #{tpu_custom_call.1} parent=1 // pred_region
      _
    $region21: #{tpu_custom_call.1} parent=1 // pred_fallthru
      _
    // Predicated region
    $region22: #{tpu_custom_call.1} parent=1 // pred_check
      _
    $region23: #{tpu_custom_call.1} parent=1 // pred_check_branch
      %197 = sbr.rel (0) target = $region25
    $region24: #{tpu_custom_call.1} parent=1 // pred_region
      %198 = dma.done [#allocation3], 128
    $region25: #{tpu_custom_call.1} parent=1 // pred_fallthru
      _
    // Predicated region
    $region26: #{tpu_custom_call.1} parent=1 // pred_check
      _
    $region27: #{tpu_custom_call.1} parent=1 // pred_check_branch
      %200 = sbr.rel (0) target = $region29
    $region28: #{tpu_custom_call.1} parent=1 // pred_region
      _
    $region29: #{tpu_custom_call.1} parent=1 // pred_fallthru
      _
    %201 = vsyncpa [#allocation3], 1

</llo_original>
